<compile_context>
chip_gen: v6e
topology: v6e:2x2x1
jax: 0.10.0
libtpu: 0.0.40
codegen_flags: <defaults>
</compile_context>

<pallas_src>
import functools

import jax
import jax.numpy as jnp
from jax.experimental import pallas as pl
from jax.experimental.pallas import tpu as pltpu


def _round_up(x, m):
    return ((x + m - 1) // m) * m


def _gcn_kernel(x_ref, adj_ref, w_ref, b_ref, out_ref, acc_ref, deg_ref, *, eps):
    """One grid step: (batch tile b, node-row tile i, node-col/reduction tile k).

    x_ref   : [BT, TK, c_in_p]   node features for the K rows of H
    adj_ref : [BT, TN, TK]       adjacency tile (output rows i, contracted cols k)
    w_ref   : [c_in_p, c_out_p]  projection-folded filter bank
    b_ref   : [1] (SMEM)         projection bias
    out_ref : [BT, TN, c_out_p]  output tile (resident across k)
    acc_ref : [BT, TN, c_out_p]  f32 accumulator scratch
    deg_ref : [BT, TN, 1]        f32 degree accumulator scratch
    """
    k = pl.program_id(2)
    nk = pl.num_programs(2)

    @pl.when(k == 0)
    def _init():
        acc_ref[...] = jnp.zeros_like(acc_ref)
        deg_ref[...] = jnp.zeros_like(deg_ref)

    bt, tk, c_in_p = x_ref.shape
    c_out_p = w_ref.shape[1]

    # H tile for the K rows: a single MXU matmul (projection already folded in).
    x2 = x_ref[...].reshape(bt * tk, c_in_p)
    h = jnp.dot(x2, w_ref[...], preferred_element_type=jnp.float32) + b_ref[0]
    h = h.reshape(bt, tk, c_out_p)

    adj = adj_ref[...]                                      # [BT, TN, TK]
    acc_ref[...] += jnp.einsum(
        "btk,bkc->btc", adj, h.astype(adj.dtype),
        preferred_element_type=jnp.float32)
    deg_ref[...] += jnp.sum(adj.astype(jnp.float32), axis=-1, keepdims=True)

    @pl.when(k == nk - 1)
    def _finalize():
        d = deg_ref[...] + eps
        inv = pl.reciprocal(d, approx=True)        # EUP slot, nearly free
        inv = inv * (2.0 - d * inv)                # one Newton step -> f32 accuracy
        out_ref[...] = (acc_ref[...] * inv).astype(out_ref.dtype)


def multihead_gcn_layer(node_feats, adj_matrix, filters, proj_w, proj_b,
                        eps=1e-4, agg_in_bf16=False):
    B, N, c_in = node_feats.shape
    F_, c_out, _ = filters.shape

    # ---- Fold Linear(F -> 1) into the filter bank (exact by linearity). ----
    # H = x @ W_comb + b  with  W_comb[i, o] = sum_f proj_w[f] * filters[f, o, i]
    w_comb = jnp.einsum("f,foi->io", proj_w.astype(jnp.float32),
                        filters.astype(jnp.float32))          # [c_in, c_out]

    # ---- Lane-dense channel padding and node tiling. ----
    c_in_p = _round_up(c_in, 128)
    c_out_p = _round_up(c_out, 128)

    max_tile = 256                    # adj tile <= 256x256 (VMEM-safe on v7x too)
    n8 = _round_up(N, 8)
    if n8 > max_tile:
        n_pad = _round_up(n8, max_tile)
        tn = tk = max_tile
    else:
        n_pad = n8
        tn = tk = n8

    # Batch several tiny graphs per grid step to amortize per-step overhead.
    bt = 1
    if tn < 256:
        bt_cap = max(1, 256 // tn)
        for d in range(min(B, bt_cap), 0, -1):
            if B % d == 0:
                bt = d
                break

    # ---- Zero-pad inputs / params (zero padding leaves the math unchanged). ----
    x = jnp.pad(node_feats.astype(jnp.float32),
                ((0, 0), (0, n_pad - N), (0, c_in_p - c_in)))
    adj = jnp.pad(adj_matrix.astype(jnp.float32),
                  ((0, 0), (0, n_pad - N), (0, n_pad - N)))
    if agg_in_bf16:
        adj = adj.astype(jnp.bfloat16)            # 0/1 entries: exact in bf16
    w = jnp.pad(w_comb, ((0, c_in_p - c_in), (0, c_out_p - c_out)))
    bias = proj_b.astype(jnp.float32).reshape(1)

    grid = (B // bt, n_pad // tn, n_pad // tk)

    # Scoped-VMEM budget for the chosen tiles (inputs/outputs double-buffered).
    adj_elt = 2 if agg_in_bf16 else 4
    vmem_bytes = (2 * bt * tk * c_in_p * 4          # x
                  + 2 * bt * tn * tk * adj_elt      # adj
                  + 2 * c_in_p * c_out_p * 4        # w_comb
                  + 2 * bt * tn * c_out_p * 4       # out
                  + bt * tn * c_out_p * 4           # acc scratch
                  + bt * tn * 128 * 4)              # deg scratch (lane-padded)
    vmem_limit = max(32 * 1024 * 1024, vmem_bytes * 3 // 2 + (4 << 20))

    kernel = functools.partial(_gcn_kernel, eps=float(eps))
    out = pl.pallas_call(
        kernel,
        out_shape=jax.ShapeDtypeStruct((B, n_pad, c_out_p), jnp.float32),
        grid=grid,
        in_specs=[
            pl.BlockSpec((bt, tk, c_in_p), lambda b, i, k: (b, k, 0)),
            pl.BlockSpec((bt, tn, tk), lambda b, i, k: (b, i, k)),
            pl.BlockSpec((c_in_p, c_out_p), lambda b, i, k: (0, 0)),
            pl.BlockSpec(memory_space=pltpu.MemorySpace.SMEM),   # proj bias [1]
        ],
        out_specs=pl.BlockSpec((bt, tn, c_out_p), lambda b, i, k: (b, i, 0)),
        scratch_shapes=[
            pltpu.VMEM((bt, tn, c_out_p), jnp.float32),
            pltpu.VMEM((bt, tn, 1), jnp.float32),
        ],
        compiler_params=pltpu.CompilerParams(
            dimension_semantics=("parallel", "parallel", "arbitrary"),
            vmem_limit_bytes=int(vmem_limit)),
    )(x, adj, w, bias)

    return out[:, :N, :c_out].astype(node_feats.dtype)


def reference(node_feats, adj_matrix, filters, proj_w, proj_b, eps=1e-4):
    """Pure-JAX transcription of the PyTorch forward (for verification)."""
    num_neighbours = adj_matrix.sum(axis=-1, keepdims=True)          # [B,N,1]
    xT = jnp.swapaxes(node_feats, -1, -2)[:, None]                   # [B,1,c_in,N]
    ext = jnp.matmul(filters, xT)                                    # [B,F,c_out,N]
    ext = jnp.swapaxes(ext, -1, -2)                                  # [B,F,N,c_out]
    ext = jnp.swapaxes(ext, 1, -1)                                   # [B,c_out,N,F]
    proj = jnp.einsum('bonf,f->bon', ext, proj_w) + proj_b[0]        # [B,c_out,N]
    h = jnp.transpose(proj, (0, 2, 1))                               # [B,N,c_out]
    out = jnp.matmul(adj_matrix, h)
    return out / (num_neighbours + eps)


if __name__ == "__main__":
    def make_inputs(key, B, N, c_in, c_out, F_):
        k_x, k_a, k_f, k_w, k_b = jax.random.split(key, 5)
        node_feats = jax.random.normal(k_x, (B, N, c_in), dtype=jnp.float32)
        # Random 0/1 adjacency with identity (self-loops) already added.
        adj = (jax.random.uniform(k_a, (B, N, N)) < 0.3).astype(jnp.float32)
        adj = jnp.clip(adj + jnp.eye(N, dtype=jnp.float32)[None], 0.0, 1.0)
        # filters: xavier_uniform on [F, c_out, c_in]
        fan_in, fan_out = c_out * c_in, F_ * c_in
        bound = (6.0 / (fan_in + fan_out)) ** 0.5
        filters = jax.random.uniform(k_f, (F_, c_out, c_in), dtype=jnp.float32,
                                     minval=-bound, maxval=bound)
        # projection: Linear(F_, 1) -> weight [F_], bias [1]
        lin_bound = 1.0 / (F_ ** 0.5)
        proj_w = jax.random.uniform(k_w, (F_,), dtype=jnp.float32,
                                    minval=-lin_bound, maxval=lin_bound)
        proj_b = jax.random.uniform(k_b, (1,), dtype=jnp.float32,
                                    minval=-lin_bound, maxval=lin_bound)
        return node_feats, adj, filters, proj_w, proj_b

    key = jax.random.PRNGKey(0)
    k_small, k_big = jax.random.split(key)

    # Small shapes: BT graphs are batched into a single grid step.
    B, N, c_in, c_out, F_ = 2, 16, 8, 12, 4
    x, adj, filt, pw, pb = make_inputs(k_small, B, N, c_in, c_out, F_)
    out = jax.block_until_ready(
        multihead_gcn_layer(x, adj, filt, pw, pb, eps=1e-4))
    ref = reference(x, adj, filt, pw, pb, eps=1e-4)
    assert out.shape == (B, N, c_out)
    assert jnp.allclose(out, ref, rtol=1e-5, atol=1e-5), "small-case mismatch"

    # bf16 aggregation path (adj exact in bf16; H rounded -> looser tolerance).
    out_bf16 = jax.block_until_ready(
        multihead_gcn_layer(x, adj, filt, pw, pb, eps=1e-4, agg_in_bf16=True))
    assert jnp.allclose(out_bf16, ref, rtol=2e-2, atol=2e-2), "bf16-case mismatch"

    # Larger N exercises the node-row/col tiling + reduction-axis accumulator.
    B2, N2 = 2, 300
    x2, adj2, filt2, pw2, pb2 = make_inputs(k_big, B2, N2, c_in, c_out, F_)
    out2 = jax.block_until_ready(
        multihead_gcn_layer(x2, adj2, filt2, pw2, pb2, eps=1e-4))
    ref2 = reference(x2, adj2, filt2, pw2, pb2, eps=1e-4)
    assert out2.shape == (B2, N2, c_out)
    assert jnp.allclose(out2, ref2, rtol=1e-4, atol=1e-4), "tiled-case mismatch"

    print("KERNEL_OK")
</pallas_src>

<mosaic_0001>
module attributes {stable_mosaic.version = 11 : i64} {
  func.func @_gcn_kernel(%arg0: i32, %arg1: i32, %arg2: i32, %arg3: memref<2x16x128xf32, #tpu.memory_space<vmem>>, %arg4: memref<2x16x16xf32, #tpu.memory_space<vmem>>, %arg5: memref<128x128xf32, #tpu.memory_space<vmem>>, %arg6: memref<1xf32, #tpu.memory_space<smem>>, %arg7: memref<2x16x128xf32, #tpu.memory_space<vmem>>, %arg8: memref<2x16x128xf32, #tpu.memory_space<vmem>>, %arg9: memref<2x16x1xf32, #tpu.memory_space<vmem>>) attributes {dimension_semantics = [#tpu.dimension_semantics<parallel>, #tpu.dimension_semantics<parallel>, #tpu.dimension_semantics<arbitrary>], iteration_bounds = array<i64: 1, 1, 1>, scalar_prefetch = 0 : i64, scratch_operands = 2 : i64, tpu.core_type = #tpu.core_type<tc>, window_params = [{transform_indices = @transform_0, window_bounds = array<i64: 2, 16, 128>}, {transform_indices = @transform_1, window_bounds = array<i64: 2, 16, 16>}, {pipeline_mode = #tpu.pipeline_mode<synchronous>, transform_indices = @transform_2, window_bounds = array<i64: 128, 128>}, {transform_indices = @transform_3, window_bounds = array<i64: 1>}, {transform_indices = @transform_4, window_bounds = array<i64: 2, 16, 128>}]} {
    %c0_i32 = arith.constant 0 : i32
    %0 = arith.cmpi eq, %arg2, %c0_i32 : i32
    %1 = arith.extui %0 : i1 to i32
    %c0_i32_0 = arith.constant 0 : i32
    %2 = arith.cmpi ne, %1, %c0_i32_0 : i32
    scf.if %2 {
      %cst_25 = arith.constant 0.000000e+00 : f32
      %24 = vector.broadcast %cst_25 : f32 to vector<2x16x128xf32>
      %c0_26 = arith.constant 0 : index
      %c0_27 = arith.constant 0 : index
      %c0_28 = arith.constant 0 : index
      %25 = vector.load %arg8[%c0_26, %c0_27, %c0_28] : memref<2x16x128xf32, #tpu.memory_space<vmem>>, vector<2x16x128xf32>
      tpu.vector_store %arg8[%c0_26, %c0_27, %c0_28], %24 {strides = array<i32>} : memref<2x16x128xf32, #tpu.memory_space<vmem>>, vector<2x16x128xf32>,
      %cst_29 = arith.constant 0.000000e+00 : f32
      %26 = vector.broadcast %cst_29 : f32 to vector<2x16x1xf32>
      %c0_30 = arith.constant 0 : index
      %c0_31 = arith.constant 0 : index
      %c0_32 = arith.constant 0 : index
      %27 = vector.load %arg9[%c0_30, %c0_31, %c0_32] : memref<2x16x1xf32, #tpu.memory_space<vmem>>, vector<2x16x1xf32>
      tpu.vector_store %arg9[%c0_30, %c0_31, %c0_32], %26 {strides = array<i32>} : memref<2x16x1xf32, #tpu.memory_space<vmem>>, vector<2x16x1xf32>,
    } else {
    }
    %c0 = arith.constant 0 : index
    %c0_1 = arith.constant 0 : index
    %c0_2 = arith.constant 0 : index
    %3 = vector.load %arg3[%c0, %c0_1, %c0_2] : memref<2x16x128xf32, #tpu.memory_space<vmem>>, vector<2x16x128xf32>
    %4 = vector.shape_cast %3 : vector<2x16x128xf32> to vector<32x128xf32>
    %c0_3 = arith.constant 0 : index
    %c0_4 = arith.constant 0 : index
    %5 = vector.load %arg5[%c0_3, %c0_4] : memref<128x128xf32, #tpu.memory_space<vmem>>, vector<128x128xf32>
    %cst = arith.constant dense<0.000000e+00> : vector<32x128xf32>
    %6 = tpu.matmul %4, %5, %cst {dimension_numbers = #tpu.dot_dimension_numbers<[1], [0], [0], [1], [0, 0, 1, 1], [], []>} : vector<32x128xf32>, vector<128x128xf32>, vector<32x128xf32> -> vector<32x128xf32>
    %c0_5 = arith.constant 0 : index
    %7 = memref.load %arg6[%c0_5] : memref<1xf32, #tpu.memory_space<smem>>
    %8 = vector.broadcast %7 : f32 to vector<32x128xf32>
    %9 = arith.addf %6, %8 : vector<32x128xf32>
    %10 = vector.shape_cast %9 : vector<32x128xf32> to vector<2x16x128xf32>
    %c0_6 = arith.constant 0 : index
    %c0_7 = arith.constant 0 : index
    %c0_8 = arith.constant 0 : index
    %11 = vector.load %arg4[%c0_6, %c0_7, %c0_8] : memref<2x16x16xf32, #tpu.memory_space<vmem>>, vector<2x16x16xf32>
    %c0_9 = arith.constant 0 : index
    %c0_10 = arith.constant 0 : index
    %c0_11 = arith.constant 0 : index
    %12 = vector.load %arg8[%c0_9, %c0_10, %c0_11] : memref<2x16x128xf32, #tpu.memory_space<vmem>>, vector<2x16x128xf32>
    "tpu.trace_start"() <{level = 10 : i32, message = "btk,bkc->btc"}> : () -> ()
    %cst_12 = arith.constant dense<0.000000e+00> : vector<2x16x128xf32>
    %13 = tpu.matmul %11, %10, %cst_12 {dimension_numbers = #tpu.dot_dimension_numbers<[2], [1], [1], [2], [0, 0, 0, 1, 1, 2], [0], [0]>} : vector<2x16x16xf32>, vector<2x16x128xf32>, vector<2x16x128xf32> -> vector<2x16x128xf32>
    "tpu.trace_stop"() : () -> ()
    %14 = arith.addf %12, %13 : vector<2x16x128xf32>
    %c0_13 = arith.constant 0 : index
    %c0_14 = arith.constant 0 : index
    %c0_15 = arith.constant 0 : index
    %15 = vector.load %arg8[%c0_13, %c0_14, %c0_15] : memref<2x16x128xf32, #tpu.memory_space<vmem>>, vector<2x16x128xf32>
    tpu.vector_store %arg8[%c0_13, %c0_14, %c0_15], %14 {strides = array<i32>} : memref<2x16x128xf32, #tpu.memory_space<vmem>>, vector<2x16x128xf32>,
    %c0_16 = arith.constant 0 : index
    %c0_17 = arith.constant 0 : index
    %c0_18 = arith.constant 0 : index
    %16 = vector.load %arg9[%c0_16, %c0_17, %c0_18] : memref<2x16x1xf32, #tpu.memory_space<vmem>>, vector<2x16x1xf32>
    %cst_19 = arith.constant dense<0.000000e+00> : vector<2x16xf32>
    %17 = vector.multi_reduction <add>, %11, %cst_19 [2] : vector<2x16x16xf32> to vector<2x16xf32>
    %18 = vector.shape_cast %17 : vector<2x16xf32> to vector<2x16x1xf32>
    %19 = arith.addf %16, %18 : vector<2x16x1xf32>
    %c0_20 = arith.constant 0 : index
    %c0_21 = arith.constant 0 : index
    %c0_22 = arith.constant 0 : index
    %20 = vector.load %arg9[%c0_20, %c0_21, %c0_22] : memref<2x16x1xf32, #tpu.memory_space<vmem>>, vector<2x16x1xf32>
    tpu.vector_store %arg9[%c0_20, %c0_21, %c0_22], %19 {strides = array<i32>} : memref<2x16x1xf32, #tpu.memory_space<vmem>>, vector<2x16x1xf32>,
    %c0_i32_23 = arith.constant 0 : i32
    %21 = arith.cmpi eq, %arg2, %c0_i32_23 : i32
    %22 = arith.extui %21 : i1 to i32
    %c0_i32_24 = arith.constant 0 : i32
    %23 = arith.cmpi ne, %22, %c0_i32_24 : i32
    scf.if %23 {
      %c0_25 = arith.constant 0 : index
      %c0_26 = arith.constant 0 : index
      %c0_27 = arith.constant 0 : index
      %24 = vector.load %arg9[%c0_25, %c0_26, %c0_27] : memref<2x16x1xf32, #tpu.memory_space<vmem>>, vector<2x16x1xf32>
      %cst_28 = arith.constant 9.99999974E-5 : f32
      %25 = vector.broadcast %cst_28 : f32 to vector<2x16x1xf32>
      %26 = arith.addf %24, %25 : vector<2x16x1xf32>
      %27 = tpu.reciprocal %26 {approx = true} : vector<2x16x1xf32> -> vector<2x16x1xf32>
      %28 = arith.mulf %26, %27 : vector<2x16x1xf32>
      %cst_29 = arith.constant 2.000000e+00 : f32
      %29 = vector.broadcast %cst_29 : f32 to vector<2x16x1xf32>
      %30 = arith.subf %29, %28 : vector<2x16x1xf32>
      %31 = arith.mulf %27, %30 : vector<2x16x1xf32>
      %c0_30 = arith.constant 0 : index
      %c0_31 = arith.constant 0 : index
      %c0_32 = arith.constant 0 : index
      %32 = vector.load %arg8[%c0_30, %c0_31, %c0_32] : memref<2x16x128xf32, #tpu.memory_space<vmem>>, vector<2x16x128xf32>
      %33 = vector.broadcast %31 : vector<2x16x1xf32> to vector<2x16x128xf32>
      %34 = arith.mulf %32, %33 : vector<2x16x128xf32>
      %c0_33 = arith.constant 0 : index
      %c0_34 = arith.constant 0 : index
      %c0_35 = arith.constant 0 : index
      %35 = vector.load %arg7[%c0_33, %c0_34, %c0_35] : memref<2x16x128xf32, #tpu.memory_space<vmem>>, vector<2x16x128xf32>
      tpu.vector_store %arg7[%c0_33, %c0_34, %c0_35], %34 {strides = array<i32>} : memref<2x16x128xf32, #tpu.memory_space<vmem>>, vector<2x16x128xf32>,
    } else {
    }
    return
  }
  func.func @transform_0(%arg0: i32, %arg1: i32, %arg2: i32) -> (i32, i32, i32) {
    %c0_i32 = arith.constant 0 : i32
    %c0_i32_0 = arith.constant 0 : i32
    return %arg0, %arg2, %c0_i32 : i32, i32, i32
  }
  func.func @transform_1(%arg0: i32, %arg1: i32, %arg2: i32) -> (i32, i32, i32) {
    %c0_i32 = arith.constant 0 : i32
    return %arg0, %arg1, %arg2 : i32, i32, i32
  }
  func.func @transform_2(%arg0: i32, %arg1: i32, %arg2: i32) -> (i32, i32) {
    %c0_i32 = arith.constant 0 : i32
    %c0_i32_0 = arith.constant 0 : i32
    %c0_i32_1 = arith.constant 0 : i32
    return %c0_i32, %c0_i32_0 : i32, i32
  }
  func.func @transform_3(%arg0: i32, %arg1: i32, %arg2: i32) -> i32 {
    %c0_i32 = arith.constant 0 : i32
    %c0_i32_0 = arith.constant 0 : i32
    return %c0_i32 : i32
  }
  func.func @transform_4(%arg0: i32, %arg1: i32, %arg2: i32) -> (i32, i32, i32) {
    %c0_i32 = arith.constant 0 : i32
    %c0_i32_0 = arith.constant 0 : i32
    return %arg0, %arg1, %c0_i32 : i32, i32, i32
  }
}

</mosaic_0001>

<llo_original>
// kernel: tpu_custom_call.1
$region0: #{tpu_custom_call.1}
  #allocation0 [shape = 'u32[]', space=smem, size = 0x4, offset = 0x4, fixed_abs, tag = 'smem constant byte address 0x4 - core index']
  #allocation1 [shape = 'u32[144,128]{1,0:T(1,128)}', space=vmem, size = 0x12000, scoped, tag = 'internal scratch']
  #allocation2 [shape = 'f32[2,16,128]{2,1,0:T(8,128)}', space=vmem, size = 0x4000, scoped, tag = 'scratch operand']
  #allocation3 [shape = 'f32[2,16,1]{2,1,0:T(8,128)}', space=vmem, size = 0x4000, scoped, tag = 'scratch operand']
  #allocation4 [shape = 'f32[1]{0:T(128)S(6)}', space=smem, size = 0x200, scoped, tag = 'scoped memory for tpu_custom_call.1']
  %s0 = inlined_call_operand.hbm [shape: f32[2,16,128], index: 0, kind: input, shape index: {}]
  %s1 = inlined_call_operand.hbm [shape: f32[2,16,16], index: 1, kind: input, shape index: {}]
  %s2 = inlined_call_operand.hbm [shape: f32[128,128], index: 2, kind: input, shape index: {}]
  %s3 = inlined_call_operand.<no memory space> [shape: f32[1], index: 3, kind: input, shape index: {}]
  %s4 = inlined_call_operand.hbm [shape: f32[2,16,128], index: 4, kind: output, shape index: {}]
  %s5 = sld [smem:[#allocation0]]
  $region46: #{tpu_custom_call.1} parent=0
    _
  %s7 = ssub.s32 1, %s5
  %s8 = scalar_select 0, %s7, %s5
  %9 = sst [smem:[#allocation4]] %s3
  $region1: #{tpu_custom_call.1} parent=0
    #allocation5 [shape = 'u8[16384]{0}', space=vmem, size = 0x4000, scoped, tag = 'input window, operand 0, single buffered']
    #allocation6 [shape = 's32[1]{0}', space=sflag, size = 0x4, scoped, tag = 'scoped memory for tpu_custom_call.1']
    #allocation7 [shape = 's32[1]{0}', space=sflag, size = 0x4, scoped, tag = 'scoped memory for tpu_custom_call.1']
    #allocation8 [shape = 'u8[16384]{0}', space=vmem, size = 0x4000, scoped, tag = 'input window, operand 1, single buffered']
    #allocation9 [shape = 's32[1]{0}', space=sflag, size = 0x4, scoped, tag = 'scoped memory for tpu_custom_call.1']
    #allocation10 [shape = 'u8[65536]{0}', space=vmem, size = 0x10000, scoped, tag = 'input window, operand 2, single buffered']
    #allocation11 [shape = 'u8[16384]{0}', space=vmem, size = 0x4000, scoped, tag = 'output window, operand 0, single buffered']
    %10 = vsyncpa [#allocation6], 0
    %11 = vsyncpa [#allocation9], 0
    %12 = vsyncpa [#allocation7], 0
    // Predicated region
    $region2: #{tpu_custom_call.1} parent=1 // pred_check
      _
    $region3: #{tpu_custom_call.1} parent=1 // pred_check_branch
      %14 = sbr.rel (0) target = $region5
    $region4: #{tpu_custom_call.1} parent=1 // pred_region
      %s16 = ssub.s32 512, 512
      %17 = vsyncadd [#allocation6], %s16
      %s18 = sshll.u32 [#allocation5], 4
      %s19 = int_to_ptr.vmem [resolvable:$true] %s18
      %24 = dma.hbm_to_vmem [thread:$0]  %s0, 512, %s19, [#allocation6], 128, 128, 8
    $region5: #{tpu_custom_call.1} parent=1 // pred_fallthru
      _
    // Predicated region
    $region6: #{tpu_custom_call.1} parent=1 // pred_check
      _
    $region7: #{tpu_custom_call.1} parent=1 // pred_check_branch
      %26 = sbr.rel (0) target = $region9
    $region8: #{tpu_custom_call.1} parent=1 // pred_region
      %s28 = ssub.s32 512, 512
      %29 = vsyncadd [#allocation9], %s28
      %s30 = sshll.u32 [#allocation8], 4
      %s31 = int_to_ptr.vmem [resolvable:$true] %s30
      %36 = dma.hbm_to_vmem [thread:$0]  %s1, 512, %s31, [#allocation9], 128, 128, 8
    $region9: #{tpu_custom_call.1} parent=1 // pred_fallthru
      _
    // Predicated region
    $region10: #{tpu_custom_call.1} parent=1 // pred_check
      _
    $region11: #{tpu_custom_call.1} parent=1 // pred_check_branch
      %38 = sbr.rel (0) target = $region13
    $region12: #{tpu_custom_call.1} parent=1 // pred_region
      %s40 = ssub.s32 2048, 2048
      %41 = vsyncadd [#allocation9], %s40
      %s42 = sshll.u32 [#allocation10], 4
      %s43 = int_to_ptr.vmem [resolvable:$true] %s42
      %48 = dma.hbm_to_vmem [thread:$0]  %s2, 2048, %s43, [#allocation9], 128, 128, 8
    $region13: #{tpu_custom_call.1} parent=1 // pred_fallthru
      _
    // Predicated region
    $region14: #{tpu_custom_call.1} parent=1 // pred_check
      _
    $region15: #{tpu_custom_call.1} parent=1 // pred_check_branch
      %50 = sbr.rel (0) target = $region17
    $region16: #{tpu_custom_call.1} parent=1 // pred_region
      _
    $region17: #{tpu_custom_call.1} parent=1 // pred_fallthru
      _
    // Predicated region
    $region18: #{tpu_custom_call.1} parent=1 // pred_check
      _
    $region19: #{tpu_custom_call.1} parent=1 // pred_check_branch
      %52 = sbr.rel (0) target = $region21
    $region20: #{tpu_custom_call.1} parent=1 // pred_region
      %53 = dma.done [#allocation6], 512
    $region21: #{tpu_custom_call.1} parent=1 // pred_fallthru
      _
    // Predicated region
    $region22: #{tpu_custom_call.1} parent=1 // pred_check
      _
    $region23: #{tpu_custom_call.1} parent=1 // pred_check_branch
      %55 = sbr.rel (0) target = $region25
    $region24: #{tpu_custom_call.1} parent=1 // pred_region
      %56 = dma.done [#allocation9], 512
    $region25: #{tpu_custom_call.1} parent=1 // pred_fallthru
      _
    // Predicated region
    $region26: #{tpu_custom_call.1} parent=1 // pred_check
      _
    $region27: #{tpu_custom_call.1} parent=1 // pred_check_branch
      %58 = sbr.rel (0) target = $region29
    $region28: #{tpu_custom_call.1} parent=1 // pred_region
      %59 = dma.done [#allocation9], 2048
    $region29: #{tpu_custom_call.1} parent=1 // pred_fallthru
      _
    %p60 = scmp.eq.s32.totalorder 0, 0
    // Predicated region
    $region30: #{tpu_custom_call.1} parent=1 // pred_check
      %p61 = pneg %p60
    $region31: #{tpu_custom_call.1} parent=1 // pred_check_branch
      %63 = sbr.rel (%p61) target = $region33
    $region32: #{tpu_custom_call.1} parent=1 // pred_region
      %64 = vst [vmem:[#allocation2] sm:$0xff] 0.0
      %65 = vst [vmem:[#allocation2 + $0x8] sm:$0xff] 0.0
      %66 = vst [vmem:[#allocation2 + $0x10] sm:$0xff] 0.0
      %67 = vst [vmem:[#allocation2 + $0x18] sm:$0xff] 0.0
      %vm68 = vcmask 7168
      %69 = vst.msk [vmem:[#allocation3] sm:$0xff] %vm68, 0.0
      %70 = vst.msk [vmem:[#allocation3 + $0x8] sm:$0xff] %vm68, 0.0
      %71 = vst.msk [vmem:[#allocation3 + $0x10] sm:$0xff] %vm68, 0.0
      %72 = vst.msk [vmem:[#allocation3 + $0x18] sm:$0xff] %vm68, 0.0
    $region33: #{tpu_custom_call.1} parent=1 // pred_fallthru
      _
    %v73 = vld [vmem:[#allocation5] sm:$0xff]
    %v74 = vld [vmem:[#allocation5 + $0x8] sm:$0xff]
    %v75 = vld [vmem:[#allocation5 + $0x10] sm:$0xff]
    %v76 = vld [vmem:[#allocation5 + $0x18] sm:$0xff]
    %v77 = vld [vmem:[#allocation10] sm:$0xff]
    %v78 = vld [vmem:[#allocation10 + $0x8] sm:$0xff]
    %v79 = vld [vmem:[#allocation10 + $0x10] sm:$0xff]
    %v80 = vld [vmem:[#allocation10 + $0x18] sm:$0xff]
    %v81 = vld [vmem:[#allocation10 + $0x20] sm:$0xff]
    %v82 = vld [vmem:[#allocation10 + $0x28] sm:$0xff]
    %v83 = vld [vmem:[#allocation10 + $0x30] sm:$0xff]
    %v84 = vld [vmem:[#allocation10 + $0x38] sm:$0xff]
    %v85 = vld [vmem:[#allocation10 + $0x40] sm:$0xff]
    %v86 = vld [vmem:[#allocation10 + $0x48] sm:$0xff]
    %v87 = vld [vmem:[#allocation10 + $0x50] sm:$0xff]
    %v88 = vld [vmem:[#allocation10 + $0x58] sm:$0xff]
    %v89 = vld [vmem:[#allocation10 + $0x60] sm:$0xff]
    %v90 = vld [vmem:[#allocation10 + $0x68] sm:$0xff]
    %v91 = vld [vmem:[#allocation10 + $0x70] sm:$0xff]
    %v92 = vld [vmem:[#allocation10 + $0x78] sm:$0xff]
    %s93 = sld [smem:[#allocation4]]
    %v94 = vstv %s93
    %95 = vmatprep.subr.mxu0 0.0
    %96 = vmatpush1.msra.mxu0 %v92
    %97 = vmatprep.subr.mxu0 0.0
    %98 = vmatpush1.msra.mxu0 %v91
    %99 = vmatprep.subr.mxu0 0.0
    %100 = vmatpush1.msra.mxu0 %v90
    %101 = vmatprep.subr.mxu0 0.0
    %102 = vmatpush1.msra.mxu0 %v89
    %103 = vmatprep.subr.mxu0 0.0
    %104 = vmatpush1.msra.mxu0 %v88
    %105 = vmatprep.subr.mxu0 0.0
    %106 = vmatpush1.msra.mxu0 %v87
    %107 = vmatprep.subr.mxu0 0.0
    %108 = vmatpush1.msra.mxu0 %v86
    %109 = vmatprep.subr.mxu0 0.0
    %110 = vmatpush1.msra.mxu0 %v85
    %111 = vmatprep.subr.mxu0 0.0
    %112 = vmatpush1.msra.mxu0 %v84
    %113 = vmatprep.subr.mxu0 0.0
    %114 = vmatpush1.msra.mxu0 %v83
    %115 = vmatprep.subr.mxu0 0.0
    %116 = vmatpush1.msra.mxu0 %v82
    %117 = vmatprep.subr.mxu0 0.0
    %118 = vmatpush1.msra.mxu0 %v81
    %119 = vmatprep.subr.mxu0 0.0
    %120 = vmatpush1.msra.mxu0 %v80
    %121 = vmatprep.subr.mxu0 0.0
    %122 = vmatpush1.msra.mxu0 %v79
    %123 = vmatprep.subr.mxu0 0.0
    %124 = vmatpush1.msra.mxu0 %v78
    %125 = vmatprep.subr.mxu0 0.0
    %126 = vmatpush1.msra.mxu0 %v77
    %127 = vmatprep.subr.mxu0 0.0
    %128 = vmatpush2.msra.mxu0 0.0
    %129 = vmatprep.subr.mxu0 0.0
    %130 = vmatpush2.msra.mxu0 0.0
    %131 = vmatprep.subr.mxu0 0.0
    %132 = vmatpush2.msra.mxu0 0.0
    %133 = vmatprep.subr.mxu0 0.0
    %134 = vmatpush2.msra.mxu0 0.0
    %135 = vmatprep.subr.mxu0 0.0
    %136 = vmatpush2.msra.mxu0 0.0
    %137 = vmatprep.subr.mxu0 0.0
    %138 = vmatpush2.msra.mxu0 0.0
    %139 = vmatprep.subr.mxu0 0.0
    %140 = vmatpush2.msra.mxu0 0.0
    %141 = vmatprep.subr.mxu0 0.0
    %142 = vmatpush2.msra.mxu0 0.0
    %143 = vmatprep.subr.mxu0 0.0
    %144 = vmatpush2.msra.mxu0 0.0
    %145 = vmatprep.subr.mxu0 0.0
    %146 = vmatpush2.msra.mxu0 0.0
    %147 = vmatprep.subr.mxu0 0.0
    %148 = vmatpush2.msra.mxu0 0.0
    %149 = vmatprep.subr.mxu0 0.0
    %150 = vmatpush2.msra.mxu0 0.0
    %151 = vmatprep.subr.mxu0 0.0
    %152 = vmatpush2.msra.mxu0 0.0
    %153 = vmatprep.subr.mxu0 0.0
    %154 = vmatpush2.msra.mxu0 0.0
    %155 = vmatprep.subr.mxu0 0.0
    %156 = vmatpush2.msra.mxu0 0.0
    %157 = vmatprep.subr.mxu0 0.0
    %158 = vmatpush2.msra.mxu0 0.0
    %159 = vmatprep.mubr.f32.mxu0 0.0
    %160 = vmatmul.mubr.f32.gmra.mxu0 %v73
    %v161 = vpop.f32.mrf.mxu0
    %v162 = vadd.f32 %v94, %v161
    %v163 = vpop.f32.mrf.mxu0
    %164 = vmatprep.mubr.f32.mxu0 0.0
    %165 = vmatmul.mubr.f32.gmra.mxu0 %v74
    %v166 = vpop.f32.mrf.mxu0
    %v167 = vadd.f32 %v94, %v166
    %v168 = vpop.f32.mrf.mxu0
    %169 = vmatprep.mubr.f32.mxu0 0.0
    %170 = vmatmul.mubr.f32.gmra.mxu0 %v75
    %v171 = vpop.f32.mrf.mxu0
    %v172 = vadd.f32 %v94, %v171
    %v173 = vpop.f32.mrf.mxu0
    %174 = vmatprep.mubr.f32.mxu0 0.0
    %175 = vmatmul.mubr.f32.gmra.mxu0 %v76
    %v176 = vpop.f32.mrf.mxu0
    %v177 = vadd.f32 %v94, %v176
    %v178 = vpop.f32.mrf.mxu0
    %179 = vdwg.mxu0
    %v180 = vld [vmem:[#allocation8] sm:$0xff]
    %v181 = vld [vmem:[#allocation8 + $0x8] sm:$0xff]
    %v182 = vld [vmem:[#allocation8 + $0x10] sm:$0xff]
    %v183 = vld [vmem:[#allocation8 + $0x18] sm:$0xff]
    %v184 = vld [vmem:[#allocation2] sm:$0xff]
    %v185 = vld [vmem:[#allocation2 + $0x8] sm:$0xff]
    %v186 = vld [vmem:[#allocation2 + $0x10] sm:$0xff]
    %v187 = vld [vmem:[#allocation2 + $0x18] sm:$0xff]
    %vm188 = vcmask 130048
    %v190 = vsel %vm188, %v180, 0
    %v193 = vsel %vm188, %v181, 0
    %195 = vmatprep.subr.mxu0 0.0
    %196 = vmatpush1.msra.mxu0 0.0
    %197 = vmatprep.subr.mxu0 0.0
    %198 = vmatpush1.msra.mxu0 0.0
    %199 = vmatprep.subr.mxu0 0.0
    %200 = vmatpush1.msra.mxu0 0.0
    %201 = vmatprep.subr.mxu0 0.0
    %202 = vmatpush1.msra.mxu0 0.0
    %203 = vmatprep.subr.mxu0 0.0
    %204 = vmatpush1.msra.mxu0 0.0
    %205 = vmatprep.subr.mxu0 0.0
    %206 = vmatpush1.msra.mxu0 0.0
    %207 = vmatprep.subr.mxu0 0.0
    %208 = vmatpush1.msra.mxu0 0.0
    %209 = vmatprep.subr.mxu0 0.0
    %210 = vmatpush1.msra.mxu0 0.0
    %211 = vmatprep.subr.mxu0 0.0
    %212 = vmatpush1.msra.mxu0 0.0
    %213 = vmatprep.subr.mxu0 0.0
    %214 = vmatpush1.msra.mxu0 0.0
    %215 = vmatprep.subr.mxu0 0.0
    %216 = vmatpush1.msra.mxu0 0.0
    %217 = vmatprep.subr.mxu0 0.0
    %218 = vmatpush1.msra.mxu0 0.0
    %219 = vmatprep.subr.mxu0 0.0
    %220 = vmatpush1.msra.mxu0 0.0
    %221 = vmatprep.subr.mxu0 0.0
    %222 = vmatpush1.msra.mxu0 0.0
    %223 = vmatprep.subr.mxu0 0.0
    %224 = vmatpush1.msra.mxu0 %v167
    %225 = vmatprep.subr.mxu0 0.0
    %226 = vmatpush1.msra.mxu0 %v162
    %227 = vmatprep.subr.mxu0 0.0
    %228 = vmatpush2.msra.mxu0 0.0
    %229 = vmatprep.subr.mxu0 0.0
    %230 = vmatpush2.msra.mxu0 0.0
    %231 = vmatprep.subr.mxu0 0.0
    %232 = vmatpush2.msra.mxu0 0.0
    %233 = vmatprep.subr.mxu0 0.0
    %234 = vmatpush2.msra.mxu0 0.0
    %235 = vmatprep.subr.mxu0 0.0
    %236 = vmatpush2.msra.mxu0 0.0
    %237 = vmatprep.subr.mxu0 0.0
    %238 = vmatpush2.msra.mxu0 0.0
    %239 = vmatprep.subr.mxu0 0.0
    %240 = vmatpush2.msra.mxu0 0.0
    %241 = vmatprep.subr.mxu0 0.0
    %242 = vmatpush2.msra.mxu0 0.0
    %243 = vmatprep.subr.mxu0 0.0
    %244 = vmatpush2.msra.mxu0 0.0
    %245 = vmatprep.subr.mxu0 0.0
    %246 = vmatpush2.msra.mxu0 0.0
    %247 = vmatprep.subr.mxu0 0.0
    %248 = vmatpush2.msra.mxu0 0.0
    %249 = vmatprep.subr.mxu0 0.0
    %250 = vmatpush2.msra.mxu0 0.0
    %251 = vmatprep.subr.mxu0 0.0
    %252 = vmatpush2.msra.mxu0 0.0
    %253 = vmatprep.subr.mxu0 0.0
    %254 = vmatpush2.msra.mxu0 0.0
    %255 = vmatprep.subr.mxu0 0.0
    %256 = vmatpush2.msra.mxu0 0.0
    %257 = vmatprep.subr.mxu0 0.0
    %258 = vmatpush2.msra.mxu0 0.0
    %259 = vmatprep.mubr.f32.mxu0 0.0
    %260 = vmatmul.mubr.f32.gmra.mxu0 %v190
    %v261 = vpop.f32.mrf.mxu0
    %v262 = vadd.f32 0.0, %v261
    %v263 = vpop.f32.mrf.mxu0
    %264 = vmatprep.mubr.f32.mxu0 0.0
    %265 = vmatmul.mubr.f32.gmra.mxu0 %v193
    %v266 = vpop.f32.mrf.mxu0
    %v267 = vadd.f32 0.0, %v266
    %v268 = vpop.f32.mrf.mxu0
    %269 = vdwg.mxu0
    %v271 = vsel %vm188, %v182, 0
    %v274 = vsel %vm188, %v183, 0
    %276 = vmatprep.subr.mxu0 0.0
    %277 = vmatpush1.msra.mxu0 0.0
    %278 = vmatprep.subr.mxu0 0.0
    %279 = vmatpush1.msra.mxu0 0.0
    %280 = vmatprep.subr.mxu0 0.0
    %281 = vmatpush1.msra.mxu0 0.0
    %282 = vmatprep.subr.mxu0 0.0
    %283 = vmatpush1.msra.mxu0 0.0
    %284 = vmatprep.subr.mxu0 0.0
    %285 = vmatpush1.msra.mxu0 0.0
    %286 = vmatprep.subr.mxu0 0.0
    %287 = vmatpush1.msra.mxu0 0.0
    %288 = vmatprep.subr.mxu0 0.0
    %289 = vmatpush1.msra.mxu0 0.0
    %290 = vmatprep.subr.mxu0 0.0
    %291 = vmatpush1.msra.mxu0 0.0
    %292 = vmatprep.subr.mxu0 0.0
    %293 = vmatpush1.msra.mxu0 0.0
    %294 = vmatprep.subr.mxu0 0.0
    %295 = vmatpush1.msra.mxu0 0.0
    %296 = vmatprep.subr.mxu0 0.0
    %297 = vmatpush1.msra.mxu0 0.0
    %298 = vmatprep.subr.mxu0 0.0
    %299 = vmatpush1.msra.mxu0 0.0
    %300 = vmatprep.subr.mxu0 0.0
    %301 = vmatpush1.msra.mxu0 0.0
    %302 = vmatprep.subr.mxu0 0.0
    %303 = vmatpush1.msra.mxu0 0.0
    %304 = vmatprep.subr.mxu0 0.0
    %305 = vmatpush1.msra.mxu0 %v177
    %306 = vmatprep.subr.mxu0 0.0
    %307 = vmatpush1.msra.mxu0 %v172
    %308 = vmatprep.subr.mxu0 0.0
    %309 = vmatpush2.msra.mxu0 0.0
    %310 = vmatprep.subr.mxu0 0.0
    %311 = vmatpush2.msra.mxu0 0.0
    %312 = vmatprep.subr.mxu0 0.0
    %313 = vmatpush2.msra.mxu0 0.0
    %314 = vmatprep.subr.mxu0 0.0
    %315 = vmatpush2.msra.mxu0 0.0
    %316 = vmatprep.subr.mxu0 0.0
    %317 = vmatpush2.msra.mxu0 0.0
    %318 = vmatprep.subr.mxu0 0.0
    %319 = vmatpush2.msra.mxu0 0.0
    %320 = vmatprep.subr.mxu0 0.0
    %321 = vmatpush2.msra.mxu0 0.0
    %322 = vmatprep.subr.mxu0 0.0
    %323 = vmatpush2.msra.mxu0 0.0
    %324 = vmatprep.subr.mxu0 0.0
    %325 = vmatpush2.msra.mxu0 0.0
    %326 = vmatprep.subr.mxu0 0.0
    %327 = vmatpush2.msra.mxu0 0.0
    %328 = vmatprep.subr.mxu0 0.0
    %329 = vmatpush2.msra.mxu0 0.0
    %330 = vmatprep.subr.mxu0 0.0
    %331 = vmatpush2.msra.mxu0 0.0
    %332 = vmatprep.subr.mxu0 0.0
    %333 = vmatpush2.msra.mxu0 0.0
    %334 = vmatprep.subr.mxu0 0.0
    %335 = vmatpush2.msra.mxu0 0.0
    %336 = vmatprep.subr.mxu0 0.0
    %337 = vmatpush2.msra.mxu0 0.0
    %338 = vmatprep.subr.mxu0 0.0
    %339 = vmatpush2.msra.mxu0 0.0
    %340 = vmatprep.mubr.f32.mxu0 0.0
    %341 = vmatmul.mubr.f32.gmra.mxu0 %v271
    %v342 = vpop.f32.mrf.mxu0
    %v343 = vadd.f32 0.0, %v342
    %v344 = vpop.f32.mrf.mxu0
    %345 = vmatprep.mubr.f32.mxu0 0.0
    %346 = vmatmul.mubr.f32.gmra.mxu0 %v274
    %v347 = vpop.f32.mrf.mxu0
    %v348 = vadd.f32 0.0, %v347
    %v349 = vpop.f32.mrf.mxu0
    %350 = vdwg.mxu0
    %v351 = vadd.f32 %v184, %v262
    %v352 = vadd.f32 %v185, %v267
    %v353 = vadd.f32 %v186, %v343
    %v354 = vadd.f32 %v187, %v348
    %355 = vst [vmem:[#allocation2] sm:$0xff] %v351
    %356 = vst [vmem:[#allocation2 + $0x8] sm:$0xff] %v352
    %357 = vst [vmem:[#allocation2 + $0x10] sm:$0xff] %v353
    %358 = vst [vmem:[#allocation2 + $0x18] sm:$0xff] %v354
    %v359 = vld [vmem:[#allocation3] sm:$0xff]
    %v360 = vld [vmem:[#allocation3 + $0x8] sm:$0xff]
    %v361 = vld [vmem:[#allocation3 + $0x10] sm:$0xff]
    %v362 = vld [vmem:[#allocation3 + $0x18] sm:$0xff]
    %v363 = vsel %vm188, %v180, 0.0
    %364 = vadd.xlane.f32.xlu0 %v363
    %v365 = vpop.xlane.xlu0 %364
    %v366 = vsel %vm188, %v181, 0.0
    %367 = vadd.xlane.f32.xlu0 %v366
    %v368 = vpop.xlane.xlu0 %367
    %v369 = vsel %vm188, %v182, 0.0
    %370 = vadd.xlane.f32.xlu0 %v369
    %v371 = vpop.xlane.xlu0 %370
    %v372 = vsel %vm188, %v183, 0.0
    %373 = vadd.xlane.f32.xlu0 %v372
    %v374 = vpop.xlane.xlu0 %373
    %v375 = vadd.f32 %v359, %v365
    %v376 = vadd.f32 %v360, %v368
    %v377 = vadd.f32 %v361, %v371
    %v378 = vadd.f32 %v362, %v374
    %vm379 = vcmask 7168
    %380 = vst.msk [vmem:[#allocation3] sm:$0xff] %vm379, %v375
    %381 = vst.msk [vmem:[#allocation3 + $0x8] sm:$0xff] %vm379, %v376
    %382 = vst.msk [vmem:[#allocation3 + $0x10] sm:$0xff] %vm379, %v377
    %383 = vst.msk [vmem:[#allocation3 + $0x18] sm:$0xff] %vm379, %v378
    // Predicated region
    $region34: #{tpu_custom_call.1} parent=1 // pred_check
      %p384 = pneg %p60
    $region35: #{tpu_custom_call.1} parent=1 // pred_check_branch
      %386 = sbr.rel (%p384) target = $region37
    $region36: #{tpu_custom_call.1} parent=1 // pred_region
      %v387 = vld [vmem:[#allocation3] sm:$0xff]
      %v388 = vld [vmem:[#allocation3 + $0x8] sm:$0xff]
      %v389 = vld [vmem:[#allocation3 + $0x10] sm:$0xff]
      %v390 = vld [vmem:[#allocation3 + $0x18] sm:$0xff]
      %v391 = vadd.f32 %v387, 0.0001
      %v392 = vadd.f32 %v388, 0.0001
      %v393 = vadd.f32 %v389, 0.0001
      %v394 = vadd.f32 %v390, 0.0001
      %v395 = vrcp.pop %v391
      %v396 = vrcp.pop %v392
      %v397 = vrcp.pop %v393
      %v398 = vrcp.pop %v394
      %v399 = vmul.f32 %v391, %v395
      %v400 = vmul.f32 %v392, %v396
      %v401 = vmul.f32 %v393, %v397
      %v402 = vmul.f32 %v394, %v398
      %v403 = vsub.f32 2.0, %v399
      %v404 = vsub.f32 2.0, %v400
      %v405 = vsub.f32 2.0, %v401
      %v406 = vsub.f32 2.0, %v402
      %v407 = vmul.f32 %v395, %v403
      %v408 = vmul.f32 %v396, %v404
      %v409 = vmul.f32 %v397, %v405
      %v410 = vmul.f32 %v398, %v406
      %v411 = vld [vmem:[#allocation2] sm:$0xff]
      %v412 = vld [vmem:[#allocation2 + $0x8] sm:$0xff]
      %v413 = vld [vmem:[#allocation2 + $0x10] sm:$0xff]
      %v414 = vld [vmem:[#allocation2 + $0x18] sm:$0xff]
      %416 = vset.pattern.permute.xlu0 0
      %417 = vperm.xlu0 %416, %v407
      %v418 = vpop.permute.xlu0 %417
      %421 = vset.pattern.permute.xlu0 0
      %422 = vperm.xlu0 %421, %v408
      %v423 = vpop.permute.xlu0 %422
      %426 = vset.pattern.permute.xlu0 0
      %427 = vperm.xlu0 %426, %v409
      %v428 = vpop.permute.xlu0 %427
      %431 = vset.pattern.permute.xlu0 0
      %432 = vperm.xlu0 %431, %v410
      %v433 = vpop.permute.xlu0 %432
      %v435 = vmul.f32 %v411, %v418
      %v436 = vmul.f32 %v412, %v423
      %v437 = vmul.f32 %v413, %v428
      %v438 = vmul.f32 %v414, %v433
      %439 = vst [vmem:[#allocation11] sm:$0xff] %v435
      %440 = vst [vmem:[#allocation11 + $0x8] sm:$0xff] %v436
      %441 = vst [vmem:[#allocation11 + $0x10] sm:$0xff] %v437
      %442 = vst [vmem:[#allocation11 + $0x18] sm:$0xff] %v438
    $region37: #{tpu_custom_call.1} parent=1 // pred_fallthru
      _
    // Predicated region
    $region38: #{tpu_custom_call.1} parent=1 // pred_check
      _
    $region39: #{tpu_custom_call.1} parent=1 // pred_check_branch
      %444 = sbr.rel (0) target = $region41
    $region40: #{tpu_custom_call.1} parent=1 // pred_region
      %s446 = ssub.s32 512, 512
      %447 = vsyncadd [#allocation7], %s446
      %s448 = sshll.u32 [#allocation11], 4
      %s449 = int_to_ptr.vmem [resolvable:$true] %s448
      %454 = dma.vmem_to_hbm [thread:$0]  %s449, 512, %s4, [#allocation7], 128, 128, 8
    $region41: #{tpu_custom_call.1} parent=1 // pred_fallthru
      _
    // Predicated region
    $region42: #{tpu_custom_call.1} parent=1 // pred_check
      _
    $region43: #{tpu_custom_call.1} parent=1 // pred_check_branch
      %456 = sbr.rel (0) target = $region45
    $region44: #{tpu_custom_call.1} parent=1 // pred_region
      %457 = dma.done [#allocation7], 512
    $region45: #{tpu_custom_call.1} parent=1 // pred_fallthru
      _
    %458 = vsyncpa [#allocation6], 1
    %459 = vsyncpa [#allocation9], 1
    %460 = vsyncpa [#allocation7], 1

</llo_original>
